<compile_context>
chip_gen: v5e
topology: v5e:2x2
jax: 0.10.0
libtpu: 0.0.40
codegen_flags: <defaults>
</compile_context>

<pallas_src>
import jax
import jax.numpy as jnp
from jax.experimental import pallas as pl
from jax.experimental.pallas import tpu as pltpu


# --------------------------------- kernel -----------------------------------

def _downsample1d_gemm_kernel(cols_ref, w_ref, b_ref, out_ref):
    """cols_ref: [Cin*K, B*T_out] bf16, w_ref: [Cout, Cin*K] bf16,
    b_ref: [Cout, 1] f32, out_ref: [Cout, B*T_out]."""
    acc = jnp.dot(w_ref[...], cols_ref[...],
                  preferred_element_type=jnp.float32)        # MXU, f32 accumulate
    out_ref[...] = (acc + b_ref[...]).astype(out_ref.dtype)


# -------------------------------- wrapper ------------------------------------

def downsample1d(x, weight, bias, *, stride=2, padding=1):
    """x: [B, C, T]; weight: [C, C, K] (PyTorch Conv1d layout); bias: [C].

    Returns [B, C, T_out] with T_out = (T + 2*padding - K)//stride + 1.
    """
    B, C, T = x.shape
    c_out, c_in, K = weight.shape
    assert c_in == C and c_out == C, (weight.shape, x.shape)
    t_out = (T + 2 * padding - K) // stride + 1

    # ---- wrapper-side layout plumbing (cheap XLA ops, tiny tensors) ----------
    xp = jnp.pad(x, ((0, 0), (0, 0), (padding, padding)))     # [B, C, T + 2*pad]
    # im2col for the strided conv: cols[b, ci, k, t] = xp[b, ci, stride*t + k]
    taps = [
        jax.lax.slice_in_dim(xp, k, k + stride * (t_out - 1) + 1, stride, axis=2)
        for k in range(K)
    ]                                                         # K x [B, C, t_out]
    cols = jnp.stack(taps, axis=2).reshape(B, C * K, t_out)   # (ci, k), k fastest
    # fold batch onto the lane axis -> lane-dense GEMM operand / output slab
    cols = cols.transpose(1, 0, 2).reshape(C * K, B * t_out)

    w2 = weight.reshape(c_out, c_in * K)                      # (ci, k), k fastest

    # MXU fast path: bf16 operands, f32 accumulation (no HIGHEST multi-pass).
    cols_bf = cols.astype(jnp.bfloat16)
    w_bf = w2.astype(jnp.bfloat16)
    b2 = bias.reshape(c_out, 1).astype(jnp.float32)

    # Whole problem in one grid step: all operands are << VMEM on every
    # generation, so per-step pipeline overhead would dominate otherwise.
    # (On v7x a 2-way "parallel" grid could use the 2nd TC, but at these shapes
    #  the extra step is pure overhead, so we keep a single step.)
    out_flat = pl.pallas_call(
        _downsample1d_gemm_kernel,
        grid=(1,),
        in_specs=[
            pl.BlockSpec((C * K, B * t_out), lambda i: (0, 0)),
            pl.BlockSpec((c_out, C * K), lambda i: (0, 0)),
            pl.BlockSpec((c_out, 1), lambda i: (0, 0)),
        ],
        out_specs=pl.BlockSpec((c_out, B * t_out), lambda i: (0, 0)),
        out_shape=jax.ShapeDtypeStruct((c_out, B * t_out), x.dtype),
        compiler_params=pltpu.CompilerParams(
            dimension_semantics=("arbitrary",)),
    )(cols_bf, w_bf, b2)

    # [Cout, B*T_out] -> [B, Cout, T_out]
    return out_flat.reshape(c_out, B, t_out).transpose(1, 0, 2)


# ----------------------------- pure-JAX reference ----------------------------

def _reference(x, weight, bias, *, stride=2, padding=1):
    out = jax.lax.conv_general_dilated(
        x, weight,
        window_strides=(stride,),
        padding=[(padding, padding)],
        dimension_numbers=("NCH", "OIH", "NCH"),
        precision=jax.lax.Precision.HIGHEST)
    return out + bias[None, :, None]


# ----------------------------------- main -------------------------------------

if __name__ == "__main__":
    B, dim, T, K = 2, 8, 16, 3

    key = jax.random.PRNGKey(0)
    kx, kw, kb = jax.random.split(key, 3)
    x = jax.random.normal(kx, (B, dim, T), jnp.float32)
    w = jax.random.normal(kw, (dim, dim, K), jnp.float32) / float((dim * K) ** 0.5)
    b = 0.1 * jax.random.normal(kb, (dim,), jnp.float32)

    # Round test data to bf16-representable values so the kernel's bf16 MXU
    # fast path is exact w.r.t. the f32 reference (exact products, f32 accum),
    # letting us keep a tight tolerance without HIGHEST-precision matmuls.
    x = x.astype(jnp.bfloat16).astype(jnp.float32)
    w = w.astype(jnp.bfloat16).astype(jnp.float32)

    out = downsample1d(x, w, b)
    out = jax.block_until_ready(out)

    ref = _reference(x, w, b)
    t_out = (T + 2 * 1 - K) // 2 + 1
    assert out.shape == (B, dim, t_out), out.shape
    max_err = float(jnp.max(jnp.abs(out - ref)))
    assert jnp.allclose(out, ref, atol=1e-4, rtol=1e-4), max_err
    print("KERNEL_OK")
</pallas_src>

<mosaic_0001>
module attributes {stable_mosaic.version = 11 : i64} {
  func.func @_downsample1d_gemm_kernel(%arg0: i32, %arg1: memref<24x16xbf16, #tpu.memory_space<vmem>>, %arg2: memref<8x24xbf16, #tpu.memory_space<vmem>>, %arg3: memref<8x1xf32, #tpu.memory_space<vmem>>, %arg4: memref<8x16xf32, #tpu.memory_space<vmem>>) attributes {dimension_semantics = [#tpu.dimension_semantics<arbitrary>], iteration_bounds = array<i64: 1>, scalar_prefetch = 0 : i64, scratch_operands = 0 : i64, tpu.core_type = #tpu.core_type<tc>, window_params = [{pipeline_mode = #tpu.pipeline_mode<synchronous>, transform_indices = @transform_0, window_bounds = array<i64: 24, 16>}, {pipeline_mode = #tpu.pipeline_mode<synchronous>, transform_indices = @transform_1, window_bounds = array<i64: 8, 24>}, {pipeline_mode = #tpu.pipeline_mode<synchronous>, transform_indices = @transform_2, window_bounds = array<i64: 8, 1>}, {pipeline_mode = #tpu.pipeline_mode<synchronous>, transform_indices = @transform_3, window_bounds = array<i64: 8, 16>}]} {
    %c0 = arith.constant 0 : index
    %c0_0 = arith.constant 0 : index
    %0 = vector.load %arg2[%c0, %c0_0] : memref<8x24xbf16, #tpu.memory_space<vmem>>, vector<8x24xbf16>
    %c0_1 = arith.constant 0 : index
    %c0_2 = arith.constant 0 : index
    %1 = vector.load %arg1[%c0_1, %c0_2] : memref<24x16xbf16, #tpu.memory_space<vmem>>, vector<24x16xbf16>
    %cst = arith.constant dense<0.000000e+00> : vector<8x16xf32>
    %2 = tpu.matmul %0, %1, %cst {dimension_numbers = #tpu.dot_dimension_numbers<[1], [0], [0], [1], [0, 0, 1, 1], [], []>} : vector<8x24xbf16>, vector<24x16xbf16>, vector<8x16xf32> -> vector<8x16xf32>
    %c0_3 = arith.constant 0 : index
    %c0_4 = arith.constant 0 : index
    %3 = vector.load %arg3[%c0_3, %c0_4] : memref<8x1xf32, #tpu.memory_space<vmem>>, vector<8x1xf32>
    %4 = vector.broadcast %3 : vector<8x1xf32> to vector<8x16xf32>
    %5 = arith.addf %2, %4 : vector<8x16xf32>
    %c0_5 = arith.constant 0 : index
    %c0_6 = arith.constant 0 : index
    %6 = vector.load %arg4[%c0_5, %c0_6] : memref<8x16xf32, #tpu.memory_space<vmem>>, vector<8x16xf32>
    tpu.vector_store %arg4[%c0_5, %c0_6], %5 {strides = array<i32>} : memref<8x16xf32, #tpu.memory_space<vmem>>, vector<8x16xf32>,
    return
  }
  func.func @transform_0(%arg0: i32) -> (i32, i32) {
    %c0_i32 = arith.constant 0 : i32
    %c0_i32_0 = arith.constant 0 : i32
    %c0_i32_1 = arith.constant 0 : i32
    return %c0_i32, %c0_i32_0 : i32, i32
  }
  func.func @transform_1(%arg0: i32) -> (i32, i32) {
    %c0_i32 = arith.constant 0 : i32
    %c0_i32_0 = arith.constant 0 : i32
    %c0_i32_1 = arith.constant 0 : i32
    return %c0_i32, %c0_i32_0 : i32, i32
  }
  func.func @transform_2(%arg0: i32) -> (i32, i32) {
    %c0_i32 = arith.constant 0 : i32
    %c0_i32_0 = arith.constant 0 : i32
    %c0_i32_1 = arith.constant 0 : i32
    return %c0_i32, %c0_i32_0 : i32, i32
  }
  func.func @transform_3(%arg0: i32) -> (i32, i32) {
    %c0_i32 = arith.constant 0 : i32
    %c0_i32_0 = arith.constant 0 : i32
    %c0_i32_1 = arith.constant 0 : i32
    return %c0_i32, %c0_i32_0 : i32, i32
  }
}

</mosaic_0001>

<llo_original>
// kernel: tpu_custom_call.1
$region0: #{tpu_custom_call.1}
  #allocation0 [shape = 'u32[]', space=smem, size = 0x4, offset = 0x4, fixed_abs, tag = 'smem constant byte address 0x4 - core index']
  #allocation1 [shape = 'u32[72,128]{1,0:T(1,128)}', space=vmem, size = 0x9000, scoped, tag = 'internal scratch']
  %s0 = inlined_call_operand.vmem [shape: bf16[24,16], index: 0, kind: input, shape index: {}]
  %s1 = inlined_call_operand.vmem [shape: bf16[8,24], index: 1, kind: input, shape index: {}]
  %s2 = inlined_call_operand.vmem [shape: f32[8,1], index: 2, kind: input, shape index: {}]
  %s3 = inlined_call_operand.hbm [shape: f32[8,16], index: 3, kind: output, shape index: {}]
  %s4 = sld [smem:[#allocation0]]
  $region22: #{tpu_custom_call.1} parent=0
    _
  %s6 = ssub.s32 1, %s4
  %s7 = scalar_select 0, %s6, %s4
  $region1: #{tpu_custom_call.1} parent=0
    #allocation2 [shape = 'u8[4096]{0}', space=vmem, size = 0x1000, scoped, tag = 'output window, operand 0, single buffered']
    #allocation3 [shape = 's32[1]{0}', space=sflag, size = 0x4, scoped, tag = 'scoped memory for tpu_custom_call.1']
    %8 = vsyncpa [#allocation3], 0
    // Predicated region
    $region2: #{tpu_custom_call.1} parent=1 // pred_check
      _
    $region3: #{tpu_custom_call.1} parent=1 // pred_check_branch
      %10 = sbr.rel (0) target = $region5
    $region4: #{tpu_custom_call.1} parent=1 // pred_region
      _
    $region5: #{tpu_custom_call.1} parent=1 // pred_fallthru
      _
    // Predicated region
    $region6: #{tpu_custom_call.1} parent=1 // pred_check
      _
    $region7: #{tpu_custom_call.1} parent=1 // pred_check_branch
      %12 = sbr.rel (0) target = $region9
    $region8: #{tpu_custom_call.1} parent=1 // pred_region
      _
    $region9: #{tpu_custom_call.1} parent=1 // pred_fallthru
      _
    // Predicated region
    $region10: #{tpu_custom_call.1} parent=1 // pred_check
      _
    $region11: #{tpu_custom_call.1} parent=1 // pred_check_branch
      %14 = sbr.rel (0) target = $region13
    $region12: #{tpu_custom_call.1} parent=1 // pred_region
      _
    $region13: #{tpu_custom_call.1} parent=1 // pred_fallthru
      _
    %v16 = vld [vmem:[%s1] sm:$0xf]
    %v17 = vld [vmem:[%s0] sm:$0xf]
    %v18 = vld [vmem:[%s0 + $0x4] sm:$0xf]
    %v19 = vld [vmem:[%s0 + $0x8] sm:$0xf]
    %v20 = vld [vmem:[%s2] sm:$0xff]
    %22 = vset.pattern.permute.xlu0 0
    %23 = vperm.xlu0 %22, %v20
    %v24 = vpop.permute.xlu0 %23
    %v29 = vunpack.c.l.b16 %v17
    %v30 = vunpack.c.l.b16 %v18
    %v31 = vunpack.c.l.b16 %v19
    %v32 = vpack.c.b16 %v30, %v29
    %v33 = vpack.c.b16 %v31, %v31
    %vm35 = vcmask 195584
    %v37 = vsel %vm35, %v16, 0
    %vm39 = vcmask 1043456
    %v41 = vsel %vm39, %v33, 0
    %43 = vmatpush.bf16.msra.mxu0 0
    %44 = vmatpush.bf16.msra.mxu0 0
    %45 = vmatpush.bf16.msra.mxu0 0
    %46 = vmatpush.bf16.msra.mxu0 0
    %47 = vmatpush.bf16.msra.mxu0 0
    %48 = vmatpush.bf16.msra.mxu0 0
    %49 = vmatpush.bf16.msra.mxu0 %v41
    %50 = vmatpush.bf16.msra.mxu0 %v32
    %51 = vmatmul.bf16.gmra.mxu0 %v37
    %v52 = vpop.f32.mrf.mxu0
    %v53 = vadd.f32 %v24, %v52
    %v54 = vpop.f32.mrf.mxu0
    %55 = vdwg.mxu0
    %vm56 = vcmask 130048
    %57 = vst.msk [vmem:[#allocation2] sm:$0xff] %vm56, %v53
    // Predicated region
    $region14: #{tpu_custom_call.1} parent=1 // pred_check
      _
    $region15: #{tpu_custom_call.1} parent=1 // pred_check_branch
      %59 = sbr.rel (0) target = $region17
    $region16: #{tpu_custom_call.1} parent=1 // pred_region
      %61 = vsyncadd [#allocation3], 0
      %s63 = sshll.u32 [#allocation2], 4
      %s64 = int_to_ptr.vmem [resolvable:$true] %s63
      %s65 = sshll.u32 %s3, 4
      %s66 = int_to_ptr.hbm [resolvable:$true] %s65
      %68 = dma.vmem_to_hbm [thread:$0]  %s64, 128, %s66, [#allocation3]
    $region17: #{tpu_custom_call.1} parent=1 // pred_fallthru
      _
    // Predicated region
    $region18: #{tpu_custom_call.1} parent=1 // pred_check
      _
    $region19: #{tpu_custom_call.1} parent=1 // pred_check_branch
      %70 = sbr.rel (0) target = $region21
    $region20: #{tpu_custom_call.1} parent=1 // pred_region
      %72 = dma.done [#allocation3], 128
    $region21: #{tpu_custom_call.1} parent=1 // pred_fallthru
      _
    %73 = vsyncpa [#allocation3], 1

</llo_original>
